<compile_context>
chip_gen: v7x
topology: tpu7x:2x2x1
jax: 0.10.0
libtpu: 0.0.40
codegen_flags: <defaults>
</compile_context>

<pallas_src>
import jax
import jax.numpy as jnp
from jax.experimental import pallas as pl
from jax.experimental.pallas import tpu as pltpu


def _round_up(x: int, m: int) -> int:
    return ((x + m - 1) // m) * m


def _choose_tb(batch: int) -> int:
    """Rows gathered per grid step: multiple of 8, <= 128; when the batch is
    large enough, pick TB so there are >= 2 grid steps (v7x has 2 TCs)."""
    tb = min(128, _round_up(batch, 8))
    if tb > 8 and (batch + tb - 1) // tb < 2:
        tb = max(8, _round_up((batch + 1) // 2, 8))
    return tb


def _gather_reward_kernel(idx_ref, w_ref, hid_ref, out_ref, gbuf, sems):
    """One grid step: gather TB last-token hidden rows, reduce against w.

    idx_ref : (B_pad,) int32  SMEM scalar prefetch (flat row ids into hid_ref)
    w_ref   : (1, H)   f32    VMEM lane-dense reward-head weight
    hid_ref : (B*S, H) native dtype, HBM (memory_space=pl.ANY)
    out_ref : (TB, 1)  f32    VMEM output block
    gbuf    : (TB, H)  native VMEM gather scratch
    sems    : (TB,)           DMA semaphores (one per gathered row)
    """
    blk = pl.program_id(0)
    tb, _ = gbuf.shape
    base = blk * tb

    # Issue all TB row gathers; they stay in flight concurrently.
    @pl.loop(0, tb)
    def _start(r):
        row = idx_ref[base + r]
        pltpu.make_async_copy(
            hid_ref.at[pl.ds(row, 1), :],
            gbuf.at[pl.ds(r, 1), :],
            sems.at[r],
        ).start()

    # Wait for all of them.
    @pl.loop(0, tb)
    def _wait(r):
        pltpu.make_async_copy(
            hid_ref.at[pl.ds(0, 1), :],
            gbuf.at[pl.ds(r, 1), :],
            sems.at[r],
        ).wait()

    # rewards[t] = sum_h hidden[t, h] * w[h]
    # VPU multiply (cast to f32 inside the multiply, no separate f32 copy of
    # the tile) + XLU lane reduce.  No MXU involvement.
    h = gbuf[...].astype(jnp.float32)            # (TB, H)
    out_ref[...] = jnp.sum(h * w_ref[...], axis=1, keepdims=True)


def process_reward_forward(last_hidden_state, attention_mask, w, b):
    """Pallas equivalent of ProcessRewardModel.forward (post-backbone part).

    last_hidden_state : (B, S, H) any float dtype (kept native in HBM)
    attention_mask    : (B, S) or None, 1 for real tokens
    w                 : (H,)   reward head weight
    b                 : ()     reward head bias
    Returns {'rewards': (B,) float32}.
    """
    B, S, H = last_hidden_state.shape
    hidden2d = last_hidden_state.reshape(B * S, H)     # contiguous, free reshape

    if attention_mask is not None:
        last_pos = jnp.sum(attention_mask.astype(jnp.int32), axis=1) - 1  # (B,)
        # PyTorch index -1 wraps to the final position; replicate explicitly.
        last_pos = jnp.where(last_pos < 0, S - 1, last_pos)
    else:
        last_pos = jnp.full((B,), S - 1, dtype=jnp.int32)
    flat_idx = jnp.arange(B, dtype=jnp.int32) * S + last_pos.astype(jnp.int32)

    tb = _choose_tb(B)
    num_blocks = (B + tb - 1) // tb
    b_pad = num_blocks * tb
    if b_pad > B:
        flat_idx = jnp.pad(flat_idx, (0, b_pad - B))   # padded slots gather row 0

    w2 = w.reshape(1, H).astype(jnp.float32)           # lane-dense weight

    itemsize = last_hidden_state.dtype.itemsize
    vmem_bytes = (tb * H * itemsize        # gather scratch
                  + 2 * tb * H * 4         # f32 working headroom
                  + 2 * H * 4              # weight (double-buffered by pipeline)
                  + 2 * tb * 4             # output buffers
                  + (1 << 20))             # slack
    vmem_limit = int(min(max(vmem_bytes, 16 << 20), 64 << 20))

    cost = pl.CostEstimate(
        flops=2 * B * H,
        transcendentals=0,
        bytes_accessed=B * H * itemsize + B * 4 + H * 4,
    )

    grid_spec = pltpu.PrefetchScalarGridSpec(
        num_scalar_prefetch=1,
        grid=(num_blocks,),
        in_specs=[
            pl.BlockSpec((1, H), lambda i, idx: (0, 0)),      # weight (resident)
            pl.BlockSpec(memory_space=pl.ANY),                # hidden rows in HBM
        ],
        out_specs=pl.BlockSpec((tb, 1), lambda i, idx: (i, 0)),
        scratch_shapes=[
            pltpu.VMEM((tb, H), last_hidden_state.dtype),
            pltpu.SemaphoreType.DMA((tb,)),
        ],
    )

    out = pl.pallas_call(
        _gather_reward_kernel,
        out_shape=jax.ShapeDtypeStruct((b_pad, 1), jnp.float32),
        grid_spec=grid_spec,
        compiler_params=pltpu.CompilerParams(
            # Grid steps are independent (each issues and waits its own DMAs),
            # so this is safe and shards blocks across v7x's two TensorCores.
            dimension_semantics=("parallel",),
            vmem_limit_bytes=vmem_limit,
        ),
        cost_estimate=cost,
    )(flat_idx, w2, hidden2d)

    rewards = out[:B, 0] + jnp.asarray(b, jnp.float32)  # bias added in wrapper
    return {"rewards": rewards}


if __name__ == "__main__":
    # Small, deterministic setup consistent with the module's forward.
    B, S, H, V = 2, 8, 32, 64
    key = jax.random.PRNGKey(0)
    k_ids, k_emb, k_w = jax.random.split(key, 3)

    # Synthetic inputs (what the tokenizer would hand to forward()).
    input_ids = jax.random.randint(k_ids, (B, S), 0, V, dtype=jnp.int32)
    attention_mask = jnp.array(
        [[1, 1, 1, 1, 1, 1, 1, 1],
         [1, 1, 1, 1, 1, 0, 0, 0]], dtype=jnp.float32)

    # Deterministic stand-in for the pretrained causal LM backbone:
    # last_hidden_state = embedding_table[input_ids]   (plain-JAX glue gather)
    embed_table = 0.02 * jax.random.normal(k_emb, (V, H), dtype=jnp.float32)
    last_hidden_state = embed_table[input_ids]          # (B, S, H)

    # reward_head = nn.Linear(H, 1): weight ~ N(0, 0.02), bias = 0
    w = 0.02 * jax.random.normal(k_w, (H,), dtype=jnp.float32)
    b = jnp.float32(0.0)

    out = process_reward_forward(last_hidden_state, attention_mask, w, b)
    rewards = jax.block_until_ready(out["rewards"])     # (B,)

    # Pure-JAX reference of the same forward semantics.
    ref_all = jnp.sum(last_hidden_state.astype(jnp.float32) * w[None, None, :],
                      axis=-1) + b                      # (B, S)
    last_pos = attention_mask.sum(axis=1).astype(jnp.int32) - 1
    last_pos = jnp.where(last_pos < 0, S - 1, last_pos)
    ref = ref_all[jnp.arange(B), last_pos]              # (B,)

    assert rewards.shape == (B,)
    assert jnp.allclose(rewards, ref, atol=1e-5, rtol=1e-4), (rewards, ref)
    print("KERNEL_OK")
</pallas_src>

<mosaic_0001>
module attributes {stable_mosaic.version = 11 : i64} {
  func.func @_gather_reward_kernel(%arg0: i32, %arg1: memref<8xi32, #tpu.memory_space<smem>>, %arg2: memref<1x32xf32, #tpu.memory_space<vmem>>, %arg3: memref<16x32xf32, #tpu.memory_space<any>>, %arg4: memref<8x1xf32, #tpu.memory_space<vmem>>, %arg5: memref<8x32xf32, #tpu.memory_space<vmem>>, %arg6: memref<8x!tpu.dma_semaphore, #tpu.memory_space<semaphore_mem>>) attributes {dimension_semantics = [#tpu.dimension_semantics<parallel>], iteration_bounds = array<i64: 1>, scalar_prefetch = 1 : i64, scratch_operands = 2 : i64, tpu.core_type = #tpu.core_type<tc>, window_params = [{pipeline_mode = #tpu.pipeline_mode<synchronous>, transform_indices = @transform_0, window_bounds = array<i64: 1, 32>}, {}, {transform_indices = @transform_2, window_bounds = array<i64: 8, 1>}]} {
    %c8_i32 = arith.constant 8 : i32
    %0 = arith.muli %arg0, %c8_i32 : i32
    %c0_i32 = arith.constant 0 : i32
    %c8_i32_0 = arith.constant 8 : i32
    %1 = arith.addi %c0_i32, %c8_i32_0 : i32
    %c1_i32 = arith.constant 1 : i32
    scf.for %arg7 = %c0_i32 to %1 step %c1_i32  : i32 {
      %c1_i32_11 = arith.constant 1 : i32
      %10 = arith.muli %arg7, %c1_i32_11 : i32
      %c0_i32_12 = arith.constant 0 : i32
      %11 = arith.addi %c0_i32_12, %10 : i32
      %12 = arith.addi %0, %11 : i32
      %13 = arith.index_cast %12 : i32 to index
      %14 = memref.load %arg1[%13] : memref<8xi32, #tpu.memory_space<smem>>
      %c0_i32_13 = arith.constant 0 : i32
      %15 = tpu.memref_slice %arg3[%14, %c0_i32_13] : memref<16x32xf32, #tpu.memory_space<any>> -> memref<1x32xf32, #tpu.memory_space<any>>
      %c0_i32_14 = arith.constant 0 : i32
      %16 = tpu.memref_slice %arg5[%11, %c0_i32_14] : memref<8x32xf32, #tpu.memory_space<vmem>> -> memref<1x32xf32, #tpu.memory_space<vmem>>
      %17 = tpu.memref_slice %arg6[%11] : memref<8x!tpu.dma_semaphore, #tpu.memory_space<semaphore_mem>> -> memref<1x!tpu.dma_semaphore, #tpu.memory_space<semaphore_mem>>
      %18 = tpu.memref_squeeze %17 : memref<1x!tpu.dma_semaphore, #tpu.memory_space<semaphore_mem>> -> memref<!tpu.dma_semaphore, #tpu.memory_space<semaphore_mem>>
      tpu.enqueue_dma source(%15 : memref<1x32xf32, #tpu.memory_space<any>>) target(%16 : memref<1x32xf32, #tpu.memory_space<vmem>>) target_semaphore(%18 : memref<!tpu.dma_semaphore, #tpu.memory_space<semaphore_mem>>)
    }
    %c8_i32_1 = arith.constant 8 : i32
    %c0_i32_2 = arith.constant 0 : i32
    %c8_i32_3 = arith.constant 8 : i32
    %2 = arith.addi %c0_i32_2, %c8_i32_3 : i32
    %c1_i32_4 = arith.constant 1 : i32
    scf.for %arg7 = %c0_i32_2 to %2 step %c1_i32_4  : i32 {
      %c1_i32_11 = arith.constant 1 : i32
      %10 = arith.muli %arg7, %c1_i32_11 : i32
      %c0_i32_12 = arith.constant 0 : i32
      %11 = arith.addi %c0_i32_12, %10 : i32
      %c0_i32_13 = arith.constant 0 : i32
      %c0_i32_14 = arith.constant 0 : i32
      %12 = tpu.memref_slice %arg3[%c0_i32_13, %c0_i32_14] : memref<16x32xf32, #tpu.memory_space<any>> -> memref<1x32xf32, #tpu.memory_space<any>>
      %c0_i32_15 = arith.constant 0 : i32
      %13 = tpu.memref_slice %arg5[%11, %c0_i32_15] : memref<8x32xf32, #tpu.memory_space<vmem>> -> memref<1x32xf32, #tpu.memory_space<vmem>>
      %14 = tpu.memref_slice %arg6[%11] : memref<8x!tpu.dma_semaphore, #tpu.memory_space<semaphore_mem>> -> memref<1x!tpu.dma_semaphore, #tpu.memory_space<semaphore_mem>>
      %15 = tpu.memref_squeeze %14 : memref<1x!tpu.dma_semaphore, #tpu.memory_space<semaphore_mem>> -> memref<!tpu.dma_semaphore, #tpu.memory_space<semaphore_mem>>
      tpu.wait_dma2 semaphore(%15 : memref<!tpu.dma_semaphore, #tpu.memory_space<semaphore_mem>>) src(%12 : memref<1x32xf32, #tpu.memory_space<any>>) dst(%13 : memref<1x32xf32, #tpu.memory_space<vmem>>)
    }
    %c8_i32_5 = arith.constant 8 : i32
    %c0 = arith.constant 0 : index
    %c0_6 = arith.constant 0 : index
    %3 = vector.load %arg5[%c0, %c0_6] : memref<8x32xf32, #tpu.memory_space<vmem>>, vector<8x32xf32>
    %c0_7 = arith.constant 0 : index
    %c0_8 = arith.constant 0 : index
    %4 = vector.load %arg2[%c0_7, %c0_8] : memref<1x32xf32, #tpu.memory_space<vmem>>, vector<1x32xf32>
    %5 = vector.broadcast %4 : vector<1x32xf32> to vector<8x32xf32>
    %6 = arith.mulf %3, %5 : vector<8x32xf32>
    %cst = arith.constant dense<0.000000e+00> : vector<8xf32>
    %7 = vector.multi_reduction <add>, %6, %cst [1] : vector<8x32xf32> to vector<8xf32>
    %8 = vector.shape_cast %7 : vector<8xf32> to vector<8x1xf32>
    %c0_9 = arith.constant 0 : index
    %c0_10 = arith.constant 0 : index
    %9 = vector.load %arg4[%c0_9, %c0_10] : memref<8x1xf32, #tpu.memory_space<vmem>>, vector<8x1xf32>
    tpu.vector_store %arg4[%c0_9, %c0_10], %8 {strides = array<i32>} : memref<8x1xf32, #tpu.memory_space<vmem>>, vector<8x1xf32>,
    return
  }
  func.func @transform_0(%arg0: i32, %arg1: memref<8xi32, #tpu.memory_space<smem>>) -> (i32, i32) {
    %c0_i32 = arith.constant 0 : i32
    %c0_i32_0 = arith.constant 0 : i32
    %c0_i32_1 = arith.constant 0 : i32
    return %c0_i32, %c0_i32_0 : i32, i32
  }
  func.func @transform_2(%arg0: i32, %arg1: memref<8xi32, #tpu.memory_space<smem>>) -> (i32, i32) {
    %c0_i32 = arith.constant 0 : i32
    %c0_i32_0 = arith.constant 0 : i32
    return %arg0, %c0_i32 : i32, i32
  }
}

</mosaic_0001>

<llo_original>
// kernel: tpu_custom_call.1
$region0: #{tpu_custom_call.1}
  #allocation0 [shape = 'u32[]', space=smem, size = 0x4, offset = 0x4, fixed_abs, tag = 'smem constant byte address 0x4 - core index']
  #allocation1 [shape = 'u32[144,128]{1,0:T(1,128)}', space=vmem, size = 0x12000, scoped, tag = 'internal scratch']
  #allocation2 [shape = 'f32[8,32]{1,0:T(8,128)}', space=vmem, size = 0x1000, scoped, tag = 'scratch operand']
  #allocation3 [shape = 's32[8]{0}', space=sflag, size = 0x20, scoped, tag = 'scratch operand']
  #allocation4 [shape = 's32[1]{0}', space=sflag, size = 0x4, scoped, tag = 'scoped memory for tpu_custom_call.1']
  #allocation5 [shape = 'u8[512]{0}', space=smem, size = 0x200, scoped, tag = 'prefetched SMEM operand 0']
  #allocation6 [shape = 's32[]', space=sflag, size = 0x4, offset = 0, fixed_abs, tag = 'sflag constant byte address 0x0 - dummy sync flag']
  #allocation7 [shape = 's32[]', space=sflag, size = 0x4, offset = 0, fixed_abs, tag = 'sflag constant byte address 0x0 - dummy sync flag']
  #allocation8 [shape = 'u32[]', space=smem, size = 0x4, offset = 0x44, fixed_abs, tag = 'smem constant byte address 0x44 - assertion arg 0']
  #allocation9 [shape = 'u32[]', space=smem, size = 0x4, offset = 0x48, fixed_abs, tag = 'smem constant byte address 0x48 - assertion arg 1']
  %s0 = inlined_call_operand.hbm [shape: s32[8], index: 0, kind: input, shape index: {}]
  %s1 = inlined_call_operand.vmem [shape: f32[1,32], index: 1, kind: input, shape index: {}]
  %s2 = inlined_call_operand.hbm [shape: f32[16,32], index: 2, kind: input, shape index: {}]
  %s3 = inlined_call_operand.vmem [shape: f32[8,1], index: 3, kind: output, shape index: {}]
  %s4 = sld [smem:[#allocation0]]
  $region32: #{tpu_custom_call.1} parent=0
    _
  %s6 = ssub.s32 1, %s4
  %s7 = scalar_select 0, %s6, %s4
  %9 = dma.hbm_to_smem %s0, 16, [#allocation5], [#allocation4]
  %10 = dma.done [#allocation4], 16
  %11 = sfence
  // Predicated region
  $region2: #{tpu_custom_call.1} parent=0 // pred_check
    _
  $region3: #{tpu_custom_call.1} parent=0 // pred_check_branch
    %13 = sbr.rel (0) target = $region5
  $region4: #{tpu_custom_call.1} parent=0 // pred_region
    _
  $region5: #{tpu_custom_call.1} parent=0 // pred_fallthru
    _
  %s14 = smul.u32 0, 8
  loop: start=0, step=1, limit=8
  $region6: #{tpu_custom_call.1} parent=0 // loop_pre_header
    _
  $region7: #{tpu_custom_call.1} parent=0 // loop_header
    %s16 = sphi 0, %s20
    %p17 = scmp.ge.s32.totalorder %s16, 8
  $region8: #{tpu_custom_call.1} parent=0 // loop_header_branch
    %19 = sbr.rel (%p17) target = $region12
  $region9: #{tpu_custom_call.1} parent=0 // loop_body
    %s21 = sadd.s32 %s14, %s16
    %s22 = sld [smem:[#allocation5 + %s21]]
    %s23 = smul.addr %s22, 16
    %s24 = scalar_lea.hbm %s2, %s23
    %s25 = scalar_lea.vmem [#allocation2], %s16
    %s26 = scalar_lea.sflag [#allocation3], %s16
    // Predicated region
    $region13: #{tpu_custom_call.1} parent=9 // pred_check
      _
    $region14: #{tpu_custom_call.1} parent=9 // pred_check_branch
      %28 = sbr.rel target = $region16
    $region15: #{tpu_custom_call.1} parent=9 // pred_region
      %29 = sst [smem:[#allocation8]] [#allocation7]
      %30 = sst [smem:[#allocation9]] [#allocation6]
    $region16: #{tpu_custom_call.1} parent=9 // pred_fallthru
      _
    %32 = shalt.err (0)
    %s34 = sshll.u32 %s25, 4
    %s35 = int_to_ptr.vmem [resolvable:$true] %s34
    %37 = dma.hbm_to_vmem [thread:$0]  %s24, 16, %s35, %s26
  $region10: #{tpu_custom_call.1} parent=0 // loop_footer
    %s20 = sadd.s32 1, %s16
  $region11: #{tpu_custom_call.1} parent=0 // loop_footer_branch
    %15 = sbr.rel target = $region7
  $region12: #{tpu_custom_call.1} parent=0 // loop_exit
    _
  loop: start=0, step=1, limit=8
  $region17: #{tpu_custom_call.1} parent=0 // loop_pre_header
    _
  $region18: #{tpu_custom_call.1} parent=0 // loop_header
    %s39 = sphi 0, %s43
    %p40 = scmp.ge.s32.totalorder %s39, 8
  $region19: #{tpu_custom_call.1} parent=0 // loop_header_branch
    %42 = sbr.rel (%p40) target = $region23
  $region20: #{tpu_custom_call.1} parent=0 // loop_body
    %s44 = scalar_lea.sflag [#allocation3], %s39
    %s45 = smul.u32 1, 1
    %s46 = sshll.u32 %s45, 4
    %47 = dma.done %s44, %s46
  $region21: #{tpu_custom_call.1} parent=0 // loop_footer
    %s43 = sadd.s32 1, %s39
  $region22: #{tpu_custom_call.1} parent=0 // loop_footer_branch
    %38 = sbr.rel target = $region18
  $region23: #{tpu_custom_call.1} parent=0 // loop_exit
    _
  %v48 = vld [vmem:[#allocation2] sm:$0xff]
  %v49 = vld [vmem:[%s1] sm:$0x1]
  %v51 = vlaneseq
  %v52 = vshrl.u32 %v51, 7
  %v53 = vsub.s32 0, %v52
  %v54 = vrot.slane %v49, %v53
  %v56 = vmul.f32 %v48, %v54
  %vm57 = vcmask 261120
  %v58 = vsel %vm57, %v56, 0.0
  %59 = vadd.xlane.f32.xlu0 %v58
  %v60 = vpop.xlane.xlu0 %59
  %vm61 = vcmask 7168
  %62 = vst.msk [vmem:[%s3] sm:$0xff] %vm61, %v60
  // Predicated region
  $region24: #{tpu_custom_call.1} parent=0 // pred_check
    _
  $region25: #{tpu_custom_call.1} parent=0 // pred_check_branch
    %64 = sbr.rel (0) target = $region27
  $region26: #{tpu_custom_call.1} parent=0 // pred_region
    _
  $region27: #{tpu_custom_call.1} parent=0 // pred_fallthru
    _
  // Predicated region
  $region28: #{tpu_custom_call.1} parent=0 // pred_check
    _
  $region29: #{tpu_custom_call.1} parent=0 // pred_check_branch
    %66 = sbr.rel (0) target = $region31
  $region30: #{tpu_custom_call.1} parent=0 // pred_region
    _
  $region31: #{tpu_custom_call.1} parent=0 // pred_fallthru
    _
  %67 = vsyncmov [#allocation3]
  %s68 = vpop.sfrf %67
  %p69 = scmp.eq.s32.totalorder %s68, 0
  %p70 = pneg %p69
  %72 = shalt.err (%p70)
  %s73 = scalar_lea.sflag [#allocation3], 1
  %74 = vsyncmov %s73
  %s75 = vpop.sfrf %74
  %p76 = scmp.eq.s32.totalorder %s75, 0
  %p77 = pneg %p76
  %79 = shalt.err (%p77)
  %s80 = scalar_lea.sflag [#allocation3], 2
  %81 = vsyncmov %s80
  %s82 = vpop.sfrf %81
  %p83 = scmp.eq.s32.totalorder %s82, 0
  %p84 = pneg %p83
  %86 = shalt.err (%p84)
  %s87 = scalar_lea.sflag [#allocation3], 3
  %88 = vsyncmov %s87
  %s89 = vpop.sfrf %88
  %p90 = scmp.eq.s32.totalorder %s89, 0
  %p91 = pneg %p90
  %93 = shalt.err (%p91)
  %s94 = scalar_lea.sflag [#allocation3], 4
  %95 = vsyncmov %s94
  %s96 = vpop.sfrf %95
  %p97 = scmp.eq.s32.totalorder %s96, 0
  %p98 = pneg %p97
  %100 = shalt.err (%p98)
  %s101 = scalar_lea.sflag [#allocation3], 5
  %102 = vsyncmov %s101
  %s103 = vpop.sfrf %102
  %p104 = scmp.eq.s32.totalorder %s103, 0
  %p105 = pneg %p104
  %107 = shalt.err (%p105)
  %s108 = scalar_lea.sflag [#allocation3], 6
  %109 = vsyncmov %s108
  %s110 = vpop.sfrf %109
  %p111 = scmp.eq.s32.totalorder %s110, 0
  %p112 = pneg %p111
  %114 = shalt.err (%p112)
  %s115 = scalar_lea.sflag [#allocation3], 7
  %116 = vsyncmov %s115
  %s117 = vpop.sfrf %116
  %p118 = scmp.eq.s32.totalorder %s117, 0
  %p119 = pneg %p118
  %121 = shalt.err (%p119)

</llo_original>
